<compile_context>
chip_gen: v7x
topology: tpu7x:2x2x1
jax: 0.10.0
libtpu: 0.0.40
codegen_flags: <defaults>
</compile_context>

<pallas_src>
import functools

import jax
import jax.numpy as jnp
import numpy as np
from jax.experimental import pallas as pl
from jax.experimental.pallas import tpu as pltpu

_LANE = 128
_SUBLANE = 8


def _cdiv(a: int, b: int) -> int:
    return (a + b - 1) // b


@functools.lru_cache(maxsize=None)
def _vmem_capacity_bytes() -> int:
    """Per-generation VMEM capacity (64 MiB on v7x, 128 MiB on v5e/v6e)."""
    try:
        get_info = getattr(pltpu, "get_tpu_info", None)
        if get_info is not None:
            return int(get_info().vmem_capacity_bytes)
    except Exception:  # pragma: no cover - conservative fallback
        pass
    return 64 * 1024 * 1024


# ----------------------------------------------------------------------------
# Kernel
# ----------------------------------------------------------------------------
def _interp_kernel(mask_ref, x_ref, o_ref, *, h: int, w: int, scale: int):
    """x_ref: (bc, h*w) channel-rows with H*W flattened into lanes.
    o_ref: (scale, scale, bc, h*w) -- output phases (dy, dx), each dense.
    mask_ref: (2, h*w) f32 {0,1}: row 0 marks first column of every image row,
    row 1 marks the last column (needed because the W-shift is done in the
    flattened lane space)."""
    hw = h * w
    x = x_ref[...].astype(jnp.float32)  # (bc, hw), f32 compute

    # --- W-direction neighbours: lane shift by 1 + row-boundary clamp -------
    if w > 1:
        prev1 = jnp.concatenate([x[:, :1], x[:, : hw - 1]], axis=1)
        next1 = jnp.concatenate([x[:, 1:], x[:, hw - 1:]], axis=1)
        m_first = jnp.broadcast_to(mask_ref[0:1, :], x.shape) > 0.5
        m_last = jnp.broadcast_to(mask_ref[1:2, :], x.shape) > 0.5
        x_wprev = jnp.where(m_first, x, prev1)   # clamp at w == 0
        x_wnext = jnp.where(m_last, x, next1)    # clamp at w == W-1
    else:
        x_wprev = x
        x_wnext = x

    for p in range(scale):                       # W phase (dx)
        fw = (p + 0.5) / scale - 0.5
        if fw < 0.0:
            col = (-fw) * x_wprev + (1.0 + fw) * x
        elif fw > 0.0:
            col = (1.0 - fw) * x + fw * x_wnext
        else:
            col = x

        # --- H-direction neighbours: shift by W lanes; clamp is automatic ---
        if h > 1:
            up = jnp.concatenate([col[:, :w], col[:, : hw - w]], axis=1)
            dn = jnp.concatenate([col[:, w:], col[:, hw - w:]], axis=1)
        else:
            up = col
            dn = col

        for q in range(scale):                   # H phase (dy)
            fh = (q + 0.5) / scale - 0.5
            if fh < 0.0:
                out = (-fh) * up + (1.0 + fh) * col
            elif fh > 0.0:
                out = (1.0 - fh) * col + fh * dn
            else:
                out = col
            o_ref[q, p, :, :] = out.astype(o_ref.dtype)


# ----------------------------------------------------------------------------
# Wrapper
# ----------------------------------------------------------------------------
@functools.partial(jax.jit, static_argnames=("scale_factor",))
def interpolate_bilinear(x: jax.Array, scale_factor: int = 2) -> jax.Array:
    """Pallas TPU equivalent of Interpolate(scale_factor, 'bilinear'),
    align_corners=False, for positive integer scale factors, NCHW layout."""
    s = int(scale_factor)
    if s < 1 or s != scale_factor:
        raise ValueError("scale_factor must be a positive integer")
    n, c, h_in, w_in = x.shape
    h_out, w_out = h_in * s, w_in * s
    nc = n * c
    hw = h_in * w_in
    itemsize = jnp.dtype(x.dtype).itemsize

    # --- channel-block sizing from the per-generation VMEM budget -----------
    cap = _vmem_capacity_bytes()
    budget = (3 * cap) // 8                       # for block sizing
    vmem_limit = (3 * cap) // 4                   # compiler limit (48/96 MiB)
    hw_pad = _cdiv(hw, _LANE) * _LANE             # lane padding inside VMEM
    # 2x double-buffered input + 2x double-buffered s^2 output + f32 temps
    per_ch = hw_pad * (2 * itemsize * (1 + s * s) + (6 + s * s) * 4)
    bc_vmem = max(1, budget // per_ch)

    # Big blocks, but >= 2 "parallel" grid steps when NC allows (v7x 2 TCs +
    # DMA/compute overlap); sublane-dense (multiple of 8) when NC is large.
    target_steps = 2 if nc < 64 else 8
    bc = min(bc_vmem, max(1, _cdiv(nc, target_steps)))
    if bc >= _SUBLANE:
        bc = (bc // _SUBLANE) * _SUBLANE
    bc = max(1, min(bc, nc))
    g = _cdiv(nc, bc)
    nc_pad = g * bc                               # pads at most bc-1 rows

    # --- NCHW -> (G, bc, H*W): pure contiguous reshapes, no transpose --------
    x_flat = x.reshape(nc, hw)
    if nc_pad != nc:
        x_flat = jnp.pad(x_flat, ((0, nc_pad - nc), (0, 0)))
    x_blk = x_flat.reshape(g, bc, hw)

    # --- row-boundary masks for the lane-flattened W stencil -----------------
    mask_np = np.zeros((2, hw), dtype=np.float32)
    if w_in > 1:
        mask_np[0, 0::w_in] = 1.0
        mask_np[1, w_in - 1::w_in] = 1.0
    masks = jnp.asarray(mask_np)

    flops = 8 * nc_pad * s * s * hw
    bytes_accessed = nc_pad * hw * itemsize * (1 + s * s) + 2 * hw * 4

    out = pl.pallas_call(
        functools.partial(_interp_kernel, h=h_in, w=w_in, scale=s),
        out_shape=jax.ShapeDtypeStruct((g, s, s, bc, hw), x.dtype),
        grid_spec=pltpu.PrefetchScalarGridSpec(
            num_scalar_prefetch=0,
            grid=(g,),
            in_specs=[
                pl.BlockSpec((2, hw), lambda i: (0, 0)),
                pl.BlockSpec((None, bc, hw), lambda i: (i, 0, 0)),
            ],
            out_specs=pl.BlockSpec((None, s, s, bc, hw),
                                   lambda i: (i, 0, 0, 0, 0)),
        ),
        compiler_params=pltpu.CompilerParams(
            dimension_semantics=("parallel",),
            vmem_limit_bytes=int(vmem_limit),
        ),
        cost_estimate=pl.CostEstimate(
            flops=int(flops), transcendentals=0,
            bytes_accessed=int(bytes_accessed)),
    )(masks, x_blk)

    # --- (G, s, s, bc, H*W) -> NCHW: one transpose + free reshapes -----------
    out = out.reshape(g, s, s, bc, h_in, w_in)
    out = out.transpose(0, 3, 4, 1, 5, 2)         # (g, bc, h, dy, w, dx)
    out = out.reshape(nc_pad, h_out, w_out)[:nc]
    return out.reshape(n, c, h_out, w_out)


class Interpolate:
    """Mirror of the PyTorch module (only mode='bilinear' is implemented)."""

    def __init__(self, scale_factor, mode):
        assert mode == "bilinear", "only mode='bilinear' is implemented"
        self.scale_factor = int(scale_factor)

    def __call__(self, x):
        return interpolate_bilinear(x, scale_factor=self.scale_factor)


# ----------------------------------------------------------------------------
# Pure-JAX reference (exact PyTorch align_corners=False semantics)
# ----------------------------------------------------------------------------
def _bilinear_matrix(l_out: int, l_in: int, scale: float) -> np.ndarray:
    w = np.zeros((l_out, l_in), dtype=np.float32)
    for o in range(l_out):
        src = (o + 0.5) / scale - 0.5
        if src < 0.0:
            src = 0.0
        i0 = min(int(np.floor(src)), l_in - 1)
        i1 = min(i0 + 1, l_in - 1)
        lam1 = src - i0
        w[o, i0] += 1.0 - lam1
        w[o, i1] += lam1
    return w


def _reference(x, scale_factor=2):
    n, c, h_in, w_in = x.shape
    s = int(scale_factor)
    h_out, w_out = h_in * s, w_in * s
    wy = jnp.asarray(_bilinear_matrix(h_out, h_in, float(s)))
    wx = jnp.asarray(_bilinear_matrix(w_out, w_in, float(s)))
    xf = x.reshape(n * c, h_in, w_in).astype(jnp.float32)
    rows = jnp.einsum("oh,bhw->bow", wy, xf)
    out = jnp.einsum("bow,pw->bop", rows, wx)
    return out.reshape(n, c, h_out, w_out)


if __name__ == "__main__":
    k0, k1, k2, k3 = jax.random.split(jax.random.PRNGKey(0), 4)

    # Primary case (matches the backbone usage): N=2, C=4, 16x16, scale 2, f32.
    x = jax.random.normal(k0, (2, 4, 16, 16), dtype=jnp.float32)
    interp = Interpolate(scale_factor=2, mode="bilinear")
    y = jax.block_until_ready(interp(x))
    assert y.shape == (2, 4, 32, 32), y.shape
    np.testing.assert_allclose(np.asarray(y), np.asarray(_reference(x, 2)),
                               rtol=1e-5, atol=1e-5)

    # Odd spatial sizes (exercises non-128-multiple lane dim / boundary masks).
    x2 = jax.random.normal(k1, (2, 3, 12, 20), dtype=jnp.float32)
    y2 = jax.block_until_ready(interpolate_bilinear(x2, scale_factor=2))
    assert y2.shape == (2, 3, 24, 40), y2.shape
    np.testing.assert_allclose(np.asarray(y2), np.asarray(_reference(x2, 2)),
                               rtol=1e-5, atol=1e-5)

    # Larger channel count: multi-block grid with sublane-dense (bc=8) blocks.
    x3 = jax.random.normal(k2, (2, 40, 16, 16), dtype=jnp.float32)
    y3 = jax.block_until_ready(interpolate_bilinear(x3, scale_factor=2))
    assert y3.shape == (2, 40, 32, 32), y3.shape
    np.testing.assert_allclose(np.asarray(y3), np.asarray(_reference(x3, 2)),
                               rtol=1e-5, atol=1e-5)

    # Non-power-of-two scale factor (general phase weights, f32-exact).
    x4 = jax.random.normal(k3, (1, 2, 5, 7), dtype=jnp.float32)
    y4 = jax.block_until_ready(interpolate_bilinear(x4, scale_factor=3))
    assert y4.shape == (1, 2, 15, 21), y4.shape
    np.testing.assert_allclose(np.asarray(y4), np.asarray(_reference(x4, 3)),
                               rtol=1e-5, atol=1e-5)

    # bf16 I/O (compute stays f32 inside the kernel).
    x_bf = x.astype(jnp.bfloat16)
    y_bf = jax.block_until_ready(interpolate_bilinear(x_bf, scale_factor=2))
    np.testing.assert_allclose(
        np.asarray(y_bf.astype(jnp.float32)),
        np.asarray(_reference(x_bf.astype(jnp.float32), 2)),
        rtol=2e-2, atol=2e-2)

    print("KERNEL_OK")
</pallas_src>

<mosaic_0001>
module attributes {stable_mosaic.version = 11 : i64} {
  func.func @_interp_kernel(%arg0: i32, %arg1: memref<2x256xf32, #tpu.memory_space<vmem>>, %arg2: memref<1x4x256xf32, #tpu.memory_space<vmem>>, %arg3: memref<1x2x2x4x256xf32, #tpu.memory_space<vmem>>) attributes {dimension_semantics = [#tpu.dimension_semantics<parallel>], iteration_bounds = array<i64: 2>, scalar_prefetch = 0 : i64, scratch_operands = 0 : i64, tpu.core_type = #tpu.core_type<tc>, window_params = [{pipeline_mode = #tpu.pipeline_mode<synchronous>, transform_indices = @transform_0, window_bounds = array<i64: 2, 256>}, {transform_indices = @transform_1, window_bounds = array<i64: 1, 4, 256>}, {transform_indices = @transform_2, window_bounds = array<i64: 1, 2, 2, 4, 256>}]} {
    %c0 = arith.constant 0 : index
    %c0_0 = arith.constant 0 : index
    %c0_1 = arith.constant 0 : index
    %0 = vector.load %arg2[%c0, %c0_0, %c0_1] : memref<1x4x256xf32, #tpu.memory_space<vmem>>, vector<1x4x256xf32>
    %1 = vector.shape_cast %0 : vector<1x4x256xf32> to vector<4x256xf32>
    %2 = vector.extract_strided_slice %1 {offsets = [0, 0], sizes = [4, 1], strides = [1, 1]} : vector<4x256xf32> to vector<4x1xf32>
    %3 = vector.extract_strided_slice %1 {offsets = [0, 0], sizes = [4, 255], strides = [1, 1]} : vector<4x256xf32> to vector<4x255xf32>
    %4 = tpu.concatenate %2, %3 in 1 : vector<4x1xf32>, vector<4x255xf32> -> vector<4x256xf32>
    %5 = vector.extract_strided_slice %1 {offsets = [0, 1], sizes = [4, 255], strides = [1, 1]} : vector<4x256xf32> to vector<4x255xf32>
    %6 = vector.extract_strided_slice %1 {offsets = [0, 255], sizes = [4, 1], strides = [1, 1]} : vector<4x256xf32> to vector<4x1xf32>
    %7 = tpu.concatenate %5, %6 in 1 : vector<4x255xf32>, vector<4x1xf32> -> vector<4x256xf32>
    %c0_2 = arith.constant 0 : index
    %c0_3 = arith.constant 0 : index
    %8 = vector.load %arg1[%c0_2, %c0_3] : memref<2x256xf32, #tpu.memory_space<vmem>>, vector<1x256xf32>
    %9 = vector.shape_cast %8 : vector<1x256xf32> to vector<1x256xf32>
    %10 = vector.broadcast %9 : vector<1x256xf32> to vector<4x256xf32>
    %cst = arith.constant 5.000000e-01 : f32
    %11 = vector.broadcast %cst : f32 to vector<4x256xf32>
    %12 = arith.cmpf ogt, %10, %11 : vector<4x256xf32>
    %c1 = arith.constant 1 : index
    %c0_4 = arith.constant 0 : index
    %13 = vector.load %arg1[%c1, %c0_4] : memref<2x256xf32, #tpu.memory_space<vmem>>, vector<1x256xf32>
    %14 = vector.shape_cast %13 : vector<1x256xf32> to vector<1x256xf32>
    %15 = vector.broadcast %14 : vector<1x256xf32> to vector<4x256xf32>
    %cst_5 = arith.constant 5.000000e-01 : f32
    %16 = vector.broadcast %cst_5 : f32 to vector<4x256xf32>
    %17 = arith.cmpf ogt, %15, %16 : vector<4x256xf32>
    %18 = arith.select %12, %1, %4 : vector<4x256xi1>, vector<4x256xf32>
    %19 = arith.select %17, %1, %7 : vector<4x256xi1>, vector<4x256xf32>
    %cst_6 = arith.constant 2.500000e-01 : f32
    %20 = vector.broadcast %cst_6 : f32 to vector<4x256xf32>
    %21 = arith.mulf %20, %18 : vector<4x256xf32>
    %cst_7 = arith.constant 7.500000e-01 : f32
    %22 = vector.broadcast %cst_7 : f32 to vector<4x256xf32>
    %23 = arith.mulf %22, %1 : vector<4x256xf32>
    %24 = arith.addf %21, %23 : vector<4x256xf32>
    %25 = vector.extract_strided_slice %24 {offsets = [0, 0], sizes = [4, 16], strides = [1, 1]} : vector<4x256xf32> to vector<4x16xf32>
    %26 = vector.extract_strided_slice %24 {offsets = [0, 0], sizes = [4, 240], strides = [1, 1]} : vector<4x256xf32> to vector<4x240xf32>
    %27 = tpu.concatenate %25, %26 in 1 : vector<4x16xf32>, vector<4x240xf32> -> vector<4x256xf32>
    %28 = vector.extract_strided_slice %24 {offsets = [0, 16], sizes = [4, 240], strides = [1, 1]} : vector<4x256xf32> to vector<4x240xf32>
    %29 = vector.extract_strided_slice %24 {offsets = [0, 240], sizes = [4, 16], strides = [1, 1]} : vector<4x256xf32> to vector<4x16xf32>
    %30 = tpu.concatenate %28, %29 in 1 : vector<4x240xf32>, vector<4x16xf32> -> vector<4x256xf32>
    %cst_8 = arith.constant 2.500000e-01 : f32
    %31 = vector.broadcast %cst_8 : f32 to vector<4x256xf32>
    %32 = arith.mulf %31, %27 : vector<4x256xf32>
    %cst_9 = arith.constant 7.500000e-01 : f32
    %33 = vector.broadcast %cst_9 : f32 to vector<4x256xf32>
    %34 = arith.mulf %33, %24 : vector<4x256xf32>
    %35 = arith.addf %32, %34 : vector<4x256xf32>
    %c0_10 = arith.constant 0 : index
    %c0_11 = arith.constant 0 : index
    %c0_12 = arith.constant 0 : index
    %c0_13 = arith.constant 0 : index
    %c0_14 = arith.constant 0 : index
    %36 = vector.load %arg3[%c0_10, %c0_11, %c0_12, %c0_13, %c0_14] : memref<1x2x2x4x256xf32, #tpu.memory_space<vmem>>, vector<1x1x1x4x256xf32>
    %37 = vector.shape_cast %36 : vector<1x1x1x4x256xf32> to vector<4x256xf32>
    %38 = vector.shape_cast %35 : vector<4x256xf32> to vector<1x1x1x4x256xf32>
    tpu.vector_store %arg3[%c0_10, %c0_11, %c0_12, %c0_13, %c0_14], %38 {strides = array<i32>} : memref<1x2x2x4x256xf32, #tpu.memory_space<vmem>>, vector<1x1x1x4x256xf32>,
    %cst_15 = arith.constant 7.500000e-01 : f32
    %39 = vector.broadcast %cst_15 : f32 to vector<4x256xf32>
    %40 = arith.mulf %39, %24 : vector<4x256xf32>
    %cst_16 = arith.constant 2.500000e-01 : f32
    %41 = vector.broadcast %cst_16 : f32 to vector<4x256xf32>
    %42 = arith.mulf %41, %30 : vector<4x256xf32>
    %43 = arith.addf %40, %42 : vector<4x256xf32>
    %c0_17 = arith.constant 0 : index
    %c1_18 = arith.constant 1 : index
    %c0_19 = arith.constant 0 : index
    %c0_20 = arith.constant 0 : index
    %c0_21 = arith.constant 0 : index
    %44 = vector.load %arg3[%c0_17, %c1_18, %c0_19, %c0_20, %c0_21] : memref<1x2x2x4x256xf32, #tpu.memory_space<vmem>>, vector<1x1x1x4x256xf32>
    %45 = vector.shape_cast %44 : vector<1x1x1x4x256xf32> to vector<4x256xf32>
    %46 = vector.shape_cast %43 : vector<4x256xf32> to vector<1x1x1x4x256xf32>
    tpu.vector_store %arg3[%c0_17, %c1_18, %c0_19, %c0_20, %c0_21], %46 {strides = array<i32>} : memref<1x2x2x4x256xf32, #tpu.memory_space<vmem>>, vector<1x1x1x4x256xf32>,
    %cst_22 = arith.constant 7.500000e-01 : f32
    %47 = vector.broadcast %cst_22 : f32 to vector<4x256xf32>
    %48 = arith.mulf %47, %1 : vector<4x256xf32>
    %cst_23 = arith.constant 2.500000e-01 : f32
    %49 = vector.broadcast %cst_23 : f32 to vector<4x256xf32>
    %50 = arith.mulf %49, %19 : vector<4x256xf32>
    %51 = arith.addf %48, %50 : vector<4x256xf32>
    %52 = vector.extract_strided_slice %51 {offsets = [0, 0], sizes = [4, 16], strides = [1, 1]} : vector<4x256xf32> to vector<4x16xf32>
    %53 = vector.extract_strided_slice %51 {offsets = [0, 0], sizes = [4, 240], strides = [1, 1]} : vector<4x256xf32> to vector<4x240xf32>
    %54 = tpu.concatenate %52, %53 in 1 : vector<4x16xf32>, vector<4x240xf32> -> vector<4x256xf32>
    %55 = vector.extract_strided_slice %51 {offsets = [0, 16], sizes = [4, 240], strides = [1, 1]} : vector<4x256xf32> to vector<4x240xf32>
    %56 = vector.extract_strided_slice %51 {offsets = [0, 240], sizes = [4, 16], strides = [1, 1]} : vector<4x256xf32> to vector<4x16xf32>
    %57 = tpu.concatenate %55, %56 in 1 : vector<4x240xf32>, vector<4x16xf32> -> vector<4x256xf32>
    %cst_24 = arith.constant 2.500000e-01 : f32
    %58 = vector.broadcast %cst_24 : f32 to vector<4x256xf32>
    %59 = arith.mulf %58, %54 : vector<4x256xf32>
    %cst_25 = arith.constant 7.500000e-01 : f32
    %60 = vector.broadcast %cst_25 : f32 to vector<4x256xf32>
    %61 = arith.mulf %60, %51 : vector<4x256xf32>
    %62 = arith.addf %59, %61 : vector<4x256xf32>
    %c0_26 = arith.constant 0 : index
    %c0_27 = arith.constant 0 : index
    %c1_28 = arith.constant 1 : index
    %c0_29 = arith.constant 0 : index
    %c0_30 = arith.constant 0 : index
    %63 = vector.load %arg3[%c0_26, %c0_27, %c1_28, %c0_29, %c0_30] : memref<1x2x2x4x256xf32, #tpu.memory_space<vmem>>, vector<1x1x1x4x256xf32>
    %64 = vector.shape_cast %63 : vector<1x1x1x4x256xf32> to vector<4x256xf32>
    %65 = vector.shape_cast %62 : vector<4x256xf32> to vector<1x1x1x4x256xf32>
    tpu.vector_store %arg3[%c0_26, %c0_27, %c1_28, %c0_29, %c0_30], %65 {strides = array<i32>} : memref<1x2x2x4x256xf32, #tpu.memory_space<vmem>>, vector<1x1x1x4x256xf32>,
    %cst_31 = arith.constant 7.500000e-01 : f32
    %66 = vector.broadcast %cst_31 : f32 to vector<4x256xf32>
    %67 = arith.mulf %66, %51 : vector<4x256xf32>
    %cst_32 = arith.constant 2.500000e-01 : f32
    %68 = vector.broadcast %cst_32 : f32 to vector<4x256xf32>
    %69 = arith.mulf %68, %57 : vector<4x256xf32>
    %70 = arith.addf %67, %69 : vector<4x256xf32>
    %c0_33 = arith.constant 0 : index
    %c1_34 = arith.constant 1 : index
    %c1_35 = arith.constant 1 : index
    %c0_36 = arith.constant 0 : index
    %c0_37 = arith.constant 0 : index
    %71 = vector.load %arg3[%c0_33, %c1_34, %c1_35, %c0_36, %c0_37] : memref<1x2x2x4x256xf32, #tpu.memory_space<vmem>>, vector<1x1x1x4x256xf32>
    %72 = vector.shape_cast %71 : vector<1x1x1x4x256xf32> to vector<4x256xf32>
    %73 = vector.shape_cast %70 : vector<4x256xf32> to vector<1x1x1x4x256xf32>
    tpu.vector_store %arg3[%c0_33, %c1_34, %c1_35, %c0_36, %c0_37], %73 {strides = array<i32>} : memref<1x2x2x4x256xf32, #tpu.memory_space<vmem>>, vector<1x1x1x4x256xf32>,
    return
  }
  func.func @transform_0(%arg0: i32) -> (i32, i32) {
    %c0_i32 = arith.constant 0 : i32
    %c0_i32_0 = arith.constant 0 : i32
    %c0_i32_1 = arith.constant 0 : i32
    return %c0_i32, %c0_i32_0 : i32, i32
  }
  func.func @transform_1(%arg0: i32) -> (i32, i32, i32) {
    %c0_i32 = arith.constant 0 : i32
    %c0_i32_0 = arith.constant 0 : i32
    %c0_i32_1 = arith.constant 0 : i32
    return %arg0, %c0_i32, %c0_i32_0 : i32, i32, i32
  }
  func.func @transform_2(%arg0: i32) -> (i32, i32, i32, i32, i32) {
    %c0_i32 = arith.constant 0 : i32
    %c0_i32_0 = arith.constant 0 : i32
    %c0_i32_1 = arith.constant 0 : i32
    %c0_i32_2 = arith.constant 0 : i32
    %c0_i32_3 = arith.constant 0 : i32
    return %arg0, %c0_i32, %c0_i32_0, %c0_i32_1, %c0_i32_2 : i32, i32, i32, i32, i32
  }
}

</mosaic_0001>

<llo_original>
// kernel: interpolate_bilinear.1
$region0: #{interpolate_bilinear.1}
  #allocation0 [shape = 'u32[]', space=smem, size = 0x4, offset = 0x4, fixed_abs, tag = 'smem constant byte address 0x4 - core index']
  #allocation1 [shape = 'u32[144,128]{1,0:T(1,128)}', space=vmem, size = 0x12000, scoped, tag = 'internal scratch']
  %s0 = inlined_call_operand.vmem [shape: f32[2,256], index: 0, kind: input, shape index: {}]
  %s1 = inlined_call_operand.vmem [shape: f32[2,4,256], index: 1, kind: input, shape index: {}]
  %s2 = inlined_call_operand.vmem [shape: f32[2,2,2,4,256], index: 2, kind: output, shape index: {}]
  %s3 = sld [smem:[#allocation0]]
  $region41: #{interpolate_bilinear.1} parent=0
    _
  %s5 = ssub.s32 1, %s3
  %s6 = scalar_select 0, %s5, %s3
  loop: start=0, step=1, limit=4
  $region2: #{interpolate_bilinear.1} parent=0 // loop_pre_header
    _
  $region3: #{interpolate_bilinear.1} parent=0 // loop_header
    %s8 = sphi 0, %s12
    %p9 = scmp.ge.s32.totalorder %s8, 4
    %s16 = sphi 0, %s16
    %s18 = sphi 0, %s16
    %s19 = sphi 0, %s18
    %s33 = sphi 0, %s19
    %s39 = sphi 0, %s41
    %s42 = sphi 0, %s39
    %s43 = sphi 0, %s42
    %s59 = sphi 0, %s43
    %s65 = sphi 0, %s67
    %s68 = sphi 0, %s65
    %s69 = sphi 0, %s68
    %s85 = sphi 0, %s69
  $region4: #{interpolate_bilinear.1} parent=0 // loop_header_branch
    %11 = sbr.rel (%p9) target = $region8
  $region5: #{interpolate_bilinear.1} parent=0 // loop_body
    %s13 = ssub.s32 %s8, 1
    %s14 = ssub.s32 %s8, 2
    %s15 = sadd.s32 %s8, 1
    %s17 = sadd.s32 %s16, 1
    %p20 = scmp.eq.s32.totalorder %s8, 1
    %p21 = scmp.ne.s32.totalorder %s16, %s18
    %p22 = scmp.eq.s32.totalorder %s8, 0
    %p23 = por %p21, %p22
    %p24 = scmp.ne.s32.totalorder %s16, %s18
    %p25 = scmp.eq.s32.totalorder %s13, 1
    %p26 = por %p24, %p25
    %p27 = scmp.ne.s32.totalorder %s18, %s19
    %p28 = scmp.eq.s32.totalorder %s13, 0
    %p29 = por %p27, %p28
    %p30 = scmp.ne.s32.totalorder %s18, %s19
    %p31 = scmp.eq.s32.totalorder %s14, 1
    %p32 = por %p30, %p31
    %p34 = scmp.ne.s32.totalorder %s19, %s33
    %p35 = scmp.eq.s32.totalorder %s14, 0
    %p36 = por %p34, %p35
    %s37 = ssub.s32 %s8, %s15
    %p38 = scmp.eq.s32.totalorder %s37, 0
    %s40 = sadd.s32 %s39, 1
    %s41 = scalar_select %p38, %s39, %s40
    %p44 = pneg %p38
    %p45 = scmp.eq.s32.totalorder %s8, 1
    %p46 = por %p44, %p45
    %p47 = scmp.ne.s32.totalorder %s39, %s42
    %p48 = scmp.eq.s32.totalorder %s8, 0
    %p49 = por %p47, %p48
    %p50 = scmp.ne.s32.totalorder %s39, %s42
    %p51 = scmp.eq.s32.totalorder %s13, 1
    %p52 = por %p50, %p51
    %p53 = scmp.ne.s32.totalorder %s42, %s43
    %p54 = scmp.eq.s32.totalorder %s13, 0
    %p55 = por %p53, %p54
    %p56 = scmp.ne.s32.totalorder %s42, %s43
    %p57 = scmp.eq.s32.totalorder %s14, 1
    %p58 = por %p56, %p57
    %p60 = scmp.ne.s32.totalorder %s43, %s59
    %p61 = scmp.eq.s32.totalorder %s14, 0
    %p62 = por %p60, %p61
    %s63 = ssub.s32 %s8, %s15
    %p64 = scmp.eq.s32.totalorder %s63, 0
    %s66 = sadd.s32 %s65, 1
    %s67 = scalar_select %p64, %s65, %s66
    %p70 = pneg %p64
    %p71 = scmp.eq.s32.totalorder %s8, 1
    %p72 = por %p70, %p71
    %p73 = scmp.ne.s32.totalorder %s65, %s68
    %p74 = scmp.eq.s32.totalorder %s8, 0
    %p75 = por %p73, %p74
    %p76 = scmp.ne.s32.totalorder %s65, %s68
    %p77 = scmp.eq.s32.totalorder %s13, 1
    %p78 = por %p76, %p77
    %p79 = scmp.ne.s32.totalorder %s68, %s69
    %p80 = scmp.eq.s32.totalorder %s13, 0
    %p81 = por %p79, %p80
    %p82 = scmp.ne.s32.totalorder %s68, %s69
    %p83 = scmp.eq.s32.totalorder %s14, 1
    %p84 = por %p82, %p83
    %p86 = scmp.ne.s32.totalorder %s69, %s85
    %p87 = scmp.eq.s32.totalorder %s14, 0
    %p88 = por %p86, %p87
    %p89 = scmp.le.s32.totalorder 1, %s8
    %p90 = scmp.lt.s32.totalorder %s8, 3
    %p91 = pnand %p89, %p90
    %p92 = pneg %p91
    // Predicated region
    $region9: #{interpolate_bilinear.1} parent=5 // pred_check
      _
    $region10: #{interpolate_bilinear.1} parent=5 // pred_check_branch
      %94 = sbr.rel (%p91) target = $region12
    $region11: #{interpolate_bilinear.1} parent=5 // pred_region
      %s95 = ssub.s32 %s8, 1
      // Predicated region
      $region13: #{interpolate_bilinear.1} parent=11 // pred_check
        %p96 = pneg %p29
      $region14: #{interpolate_bilinear.1} parent=11 // pred_check_branch
        %98 = sbr.rel (%p96) target = $region16
      $region15: #{interpolate_bilinear.1} parent=11 // pred_region
        _
      $region16: #{interpolate_bilinear.1} parent=11 // pred_fallthru
        _
    $region12: #{interpolate_bilinear.1} parent=5 // pred_fallthru
      _
    %p99 = scmp.lt.s32.totalorder %s8, 2
    // Predicated region
    $region17: #{interpolate_bilinear.1} parent=5 // pred_check
      %p100 = pneg %p99
    $region18: #{interpolate_bilinear.1} parent=5 // pred_check_branch
      %102 = sbr.rel (%p100) target = $region20
    $region19: #{interpolate_bilinear.1} parent=5 // pred_region
      // Predicated region
      $region21: #{interpolate_bilinear.1} parent=19 // pred_check
        %p103 = pneg %p49
      $region22: #{interpolate_bilinear.1} parent=19 // pred_check_branch
        %105 = sbr.rel (%p103) target = $region24
      $region23: #{interpolate_bilinear.1} parent=19 // pred_region
        %p106 = scmp.lt.s32.totalorder %s8, 1
        %s107 = scalar_select %p106, %s8, 1
        %s108 = smul.addr %s107, 2
        %s109 = smul.addr %s108, 4
        %s110 = scalar_lea.vmem %s1, %s109
      $region24: #{interpolate_bilinear.1} parent=19 // pred_fallthru
        _
    $region20: #{interpolate_bilinear.1} parent=5 // pred_fallthru
      _
    %p111 = scmp.le.s32.totalorder 1, %s8
    %p112 = scmp.lt.s32.totalorder %s8, 3
    %p113 = pnand %p111, %p112
    %p114 = pneg %p113
    // Predicated region
    $region25: #{interpolate_bilinear.1} parent=5 // pred_check
      _
    $region26: #{interpolate_bilinear.1} parent=5 // pred_check_branch
      %116 = sbr.rel (%p113) target = $region28
    $region27: #{interpolate_bilinear.1} parent=5 // pred_region
      %s117 = ssub.s32 %s8, 1
      %p118 = pneg %p29
      %p119 = pneg %p26
      %p120 = scmp.lt.s32.totalorder %s13, 1
      %s121 = scalar_select %p120, %s13, 1
      %s122 = smul.addr %s121, 2
      %s123 = smul.addr %s122, 4
      %s124 = scalar_lea.vmem %s1, %s123
      %p125 = pneg %p55
      %p126 = pneg %p52
      %p127 = pneg %p81
      %p128 = pneg %p78
      %p129 = scmp.lt.s32.totalorder %s13, 1
      %s130 = scalar_select %p129, %s13, 1
      %s131 = smul.addr %s130, 8
      %s132 = smul.addr %s131, 4
      %s133 = scalar_lea.vmem %s2, %s132
      %p134 = scmp.lt.s32.totalorder %s13, 1
      %s135 = scalar_select %p134, %s13, 1
      %s136 = smul.addr %s135, 2
      %s137 = smul.addr %s136, 4
      %s138 = scalar_lea.vmem %s1, %s137
      %p139 = scmp.lt.s32.totalorder %s13, 1
      %s140 = scalar_select %p139, %s13, 1
      %s141 = smul.addr %s140, 8
      %s142 = smul.addr %s141, 4
      %s143 = scalar_lea.vmem %s2, %s142
      %v144 = vld [vmem:[%s138] sm:$0xff]
      %v146 = vcombine.high %v144, %v144
      %147 = vrot.lane.b32.xlu0 %v144, 1
      %v148 = vpop.permute.xlu0 %147
      %149 = vrot.lane.b32.xlu0 %v146, 1
      %v150 = vpop.permute.xlu0 %149
      %vm151 = vcmask 7168
      %v152 = vsel %vm151, %v148, %v150
      %v155 = vsel %vm151, %v144, %v148
      %156 = vrot.lane.b32.xlu0 %v144, 127
      %v157 = vpop.permute.xlu0 %156
      %158 = vrot.lane.b32.xlu0 %v146, 127
      %v159 = vpop.permute.xlu0 %158
      %vm160 = vcmask 1039360
      %v161 = vsel %vm160, %v157, %v159
      %v165 = vsel %vm160, %v159, %v146
      %v166 = vld [vmem:[%s0] ss:$2 sm:$0x3]
      %v168 = vlaneseq
      %v169 = vshrl.u32 %v168, 7
      %v170 = vsub.s32 0, %v169
      %v171 = vrot.slane %v166, %v170
      %v172 = vlaneseq
      %v173 = vshrl.u32 %v172, 7
      %v174 = vsub.s32 1, %v173
      %v175 = vrot.slane %v166, %v174
      %vm178 = vcmp.gt.f32.partialorder %v171, 0.5
      %vm179 = vcmp.gt.f32.partialorder %v175, 0.5
      %s180 = scalar_lea.vmem %s0, 1
      %v181 = vld [vmem:[%s180] ss:$2 sm:$0x3]
      %v183 = vlaneseq
      %v184 = vshrl.u32 %v183, 7
      %v185 = vsub.s32 0, %v184
      %v186 = vrot.slane %v181, %v185
      %v187 = vlaneseq
      %v188 = vshrl.u32 %v187, 7
      %v189 = vsub.s32 1, %v188
      %v190 = vrot.slane %v181, %v189
      %vm193 = vcmp.gt.f32.partialorder %v186, 0.5
      %vm194 = vcmp.gt.f32.partialorder %v190, 0.5
      %v195 = vsel %vm178, %v144, %v155
      %v196 = vsel %vm179, %v146, %v152
      %v197 = vsel %vm193, %v144, %v161
      %v198 = vsel %vm194, %v146, %v165
      %v199 = vmul.f32 %v195, 0.25
      %v200 = vmul.f32 %v196, 0.25
      %v201 = vmul.f32 %v144, 0.75
      %v203 = vcombine.high %v201, %v201
      %v205 = vadd.f32 %v199, %v201
      %v206 = vadd.f32 %v200, %v203
      %209 = vrot.lane.b32.xlu0 %v205, 16
      %v210 = vpop.permute.xlu0 %209
      %211 = vrot.lane.b32.xlu0 %v206, 16
      %v212 = vpop.permute.xlu0 %211
      %vm213 = vcmask 130048
      %v214 = vsel %vm213, %v210, %v212
      %v217 = vsel %vm213, %v205, %v210
      %218 = vrot.lane.b32.xlu0 %v205, 112
      %v219 = vpop.permute.xlu0 %218
      %220 = vrot.lane.b32.xlu0 %v206, 112
      %v221 = vpop.permute.xlu0 %220
      %vm222 = vcmask 916480
      %v223 = vsel %vm222, %v219, %v221
      %v226 = vsel %vm222, %v221, %v206
      %v227 = vmul.f32 %v217, 0.25
      %v228 = vmul.f32 %v214, 0.25
      %v229 = vmul.f32 %v205, 0.75
      %v230 = vmul.f32 %v206, 0.75
      %v231 = vadd.f32 %v227, %v229
      %v232 = vadd.f32 %v228, %v230
      %v235 = vcombine.low %v231, %v232
      %237 = vst [vmem:[%s143] sm:$0xff] %v235
      %v238 = vmul.f32 %v223, 0.25
      %v239 = vmul.f32 %v226, 0.25
      %v240 = vadd.f32 %v229, %v238
      %v241 = vadd.f32 %v230, %v239
      %v244 = vcombine.low %v240, %v241
      %s246 = scalar_lea.vmem %s143, 16
      %247 = vst [vmem:[%s246] sm:$0xff] %v244
      %v248 = vmul.f32 %v197, 0.25
      %v249 = vmul.f32 %v198, 0.25
      %v252 = vcombine.low %v248, %v249
      %v254 = vadd.f32 %v201, %v252
      %v256 = vcombine.high %v254, %v254
      %257 = vrot.lane.b32.xlu0 %v254, 16
      %v258 = vpop.permute.xlu0 %257
      %259 = vrot.lane.b32.xlu0 %v256, 16
      %v260 = vpop.permute.xlu0 %259
      %v261 = vsel %vm213, %v258, %v260
      %v264 = vsel %vm213, %v254, %v258
      %265 = vrot.lane.b32.xlu0 %v254, 112
      %v266 = vpop.permute.xlu0 %265
      %267 = vrot.lane.b32.xlu0 %v256, 112
      %v268 = vpop.permute.xlu0 %267
      %v269 = vsel %vm222, %v266, %v268
      %v273 = vsel %vm222, %v268, %v256
      %v274 = vmul.f32 %v264, 0.25
      %v275 = vmul.f32 %v261, 0.25
      %v276 = vmul.f32 %v254, 0.75
      %v278 = vcombine.high %v276, %v276
      %v280 = vadd.f32 %v274, %v276
      %v281 = vadd.f32 %v275, %v278
      %v284 = vcombine.low %v280, %v281
      %s286 = scalar_lea.vmem %s143, 8
      %287 = vst [vmem:[%s286] sm:$0xff] %v284
      %v288 = vmul.f32 %v269, 0.25
      %v289 = vmul.f32 %v273, 0.25
      %v292 = vcombine.low %v288, %v289
      %v294 = vadd.f32 %v276, %v292
      %s295 = scalar_lea.vmem %s143, 24
      %296 = vst [vmem:[%s295] sm:$0xff] %v294
      %p297 = scmp.lt.s32.totalorder %s13, 1
      %s298 = scalar_select %p297, %s13, 1
      %s299 = smul.addr %s298, 8
      %s300 = smul.addr %s299, 4
      %s301 = scalar_lea.vmem %s2, %s300
      // Predicated region
      $region29: #{interpolate_bilinear.1} parent=27 // pred_check
        %p302 = pneg %p78
      $region30: #{interpolate_bilinear.1} parent=27 // pred_check_branch
        %304 = sbr.rel (%p302) target = $region32
      $region31: #{interpolate_bilinear.1} parent=27 // pred_region
        _
      $region32: #{interpolate_bilinear.1} parent=27 // pred_fallthru
        _
    $region28: #{interpolate_bilinear.1} parent=5 // pred_fallthru
      _
    %p305 = scmp.le.s32.totalorder 2, %s8
    // Predicated region
    $region33: #{interpolate_bilinear.1} parent=5 // pred_check
      %p306 = pneg %p305
    $region34: #{interpolate_bilinear.1} parent=5 // pred_check_branch
      %308 = sbr.rel (%p306) target = $region36
    $region35: #{interpolate_bilinear.1} parent=5 // pred_region
      %s309 = ssub.s32 %s8, 2
      // Predicated region
      $region37: #{interpolate_bilinear.1} parent=35 // pred_check
        %p310 = pneg %p84
      $region38: #{interpolate_bilinear.1} parent=35 // pred_check_branch
        %312 = sbr.rel (%p310) target = $region40
      $region39: #{interpolate_bilinear.1} parent=35 // pred_region
        %p313 = scmp.lt.s32.totalorder %s14, 1
        %s314 = scalar_select %p313, %s14, 1
        %s315 = smul.addr %s314, 8
        %s316 = smul.addr %s315, 4
        %s317 = scalar_lea.vmem %s2, %s316
      $region40: #{interpolate_bilinear.1} parent=35 // pred_fallthru
        _
    $region36: #{interpolate_bilinear.1} parent=5 // pred_fallthru
      _
  $region6: #{interpolate_bilinear.1} parent=0 // loop_footer
    %s12 = sadd.s32 1, %s8
  $region7: #{interpolate_bilinear.1} parent=0 // loop_footer_branch
    %7 = sbr.rel target = $region3
  $region8: #{interpolate_bilinear.1} parent=0 // loop_exit
    _

</llo_original>
